<compile_context>
chip_gen: v7x
topology: tpu7x:2x2x1
jax: 0.10.0
libtpu: 0.0.40
codegen_flags: <defaults>
</compile_context>

<pallas_src>
import jax
import jax.numpy as jnp
from jax.experimental import pallas as pl
from jax.experimental.pallas import tpu as pltpu


def _round_up(x, m):
    return (x + m - 1) // m * m


def _pos_probe_kernel(h_ref, w_ref, b_ref, o_ref):
    """One grid step handles TM flattened (batch*seq) rows.

    h_ref: (TM, D)  VMEM  row tile of the flattened activations
    w_ref: (D, V)   VMEM  full weight (resident across the grid)
    b_ref: (1, V)   VMEM  full bias   (resident across the grid)
    o_ref: (TM, V)  VMEM  output tile (narrow, exactly V columns)
    """
    # Linear: H @ W + b on the MXU, accumulated in f32.
    wh = jnp.dot(h_ref[...], w_ref[...],
                 preferred_element_type=jnp.float32) + b_ref[...]   # (TM, V) f32

    # Numerically stable log_softmax over the last dim, reusing o_ref as the
    # scratch buffer for the shifted logits (saves one full-tile temporary).
    m = jnp.max(wh, axis=-1, keepdims=True)                          # (TM, 1)
    o_ref[...] = wh - m
    lse = jnp.log(jnp.sum(jnp.exp(o_ref[...]), axis=-1, keepdims=True))
    o_ref[...] = o_ref[...] - lse


def pos_probe_forward(H, W, b, *, tm=1024, use_bf16=False):
    """H: (B, S, D); W: (V, D) (PyTorch nn.Linear layout); b: (V,)."""
    B, S, D = H.shape
    V = W.shape[0]
    N = B * S

    in_dtype = jnp.bfloat16 if use_bf16 else jnp.float32
    in_isz = jnp.dtype(in_dtype).itemsize

    # ---- row-tile selection ---------------------------------------------
    tm = _round_up(max(int(tm), 8), 8)                    # sublane-legal
    TM = min(tm, _round_up(N, 8))                         # no bigger than the row count
    # Ensure >= 2 grid steps whenever possible so both v7x TensorCores get work.
    TM = min(TM, max(8, _round_up(pl.cdiv(N, 2), 8)))
    TM = max(TM, 8)

    lane = 128

    def _working_set_bytes(tm_rows):
        h_tile = tm_rows * _round_up(D, lane) * in_isz          # H tile (VMEM layout)
        o_tile = tm_rows * _round_up(V, lane) * 4               # output tile
        w_full = _round_up(D, 8) * _round_up(V, lane) * in_isz  # resident weight
        b_full = 8 * lane * 4                                   # resident bias
        temps = 2 * tm_rows * _round_up(V, lane) * 4            # wh + exp temporaries
        return 2 * (h_tile + o_tile) + w_full + b_full + temps  # double-buffered streams

    VMEM_BUDGET = 40 * 1024 * 1024        # conservative across v5e/v6e (128 MiB) and v7x (64 MiB/TC)
    while TM > 8 and _working_set_bytes(TM) > VMEM_BUDGET:
        TM = max(8, _round_up(TM // 2, 8))

    vmem_limit = int(min(64 * 1024 * 1024,
                         max(32 * 1024 * 1024, 2 * _working_set_bytes(TM))))

    grid = pl.cdiv(N, TM)                 # ragged last block; no row padding of H

    # ---- glue in plain JAX (free reshapes / tiny weight transpose) --------
    Hf = H.reshape(N, D).astype(in_dtype)
    Wt = W.T.astype(in_dtype)                      # (D, V) matmul RHS layout
    bp = b.reshape(1, V).astype(jnp.float32)

    out = pl.pallas_call(
        _pos_probe_kernel,
        out_shape=jax.ShapeDtypeStruct((N, V), jnp.float32),
        grid_spec=pltpu.PrefetchScalarGridSpec(
            num_scalar_prefetch=0,
            grid=(grid,),
            in_specs=[
                pl.BlockSpec((TM, D), lambda i: (i, 0)),                 # streamed row tile
                pl.BlockSpec((D, V), lambda i: (0, 0),
                             pipeline_mode=pl.Buffered(1)),              # resident weight
                pl.BlockSpec((1, V), lambda i: (0, 0),
                             pipeline_mode=pl.Buffered(1)),              # resident bias
            ],
            out_specs=pl.BlockSpec((TM, V), lambda i: (i, 0)),           # narrow output tile
        ),
        compiler_params=pltpu.CompilerParams(
            dimension_semantics=("parallel",),
            vmem_limit_bytes=vmem_limit,
        ),
        cost_estimate=pl.CostEstimate(
            flops=2 * N * D * V,
            transcendentals=N * V,
            bytes_accessed=N * D * in_isz + D * V * in_isz + V * 4 + N * V * 4,
        ),
    )(Hf, Wt, bp)

    # (N, V) -> (B, S, V) is a free metadata reshape; no slicing needed.
    return out.reshape(B, S, V)


def _reference(H, W, b):
    wh = jnp.einsum("bsd,vd->bsv", H, W) + b
    return jax.nn.log_softmax(wh, axis=-1)


if __name__ == "__main__":
    key = jax.random.PRNGKey(0)
    kH, kW, kb, kH2 = jax.random.split(key, 4)

    # Small shapes consistent with the module's forward:
    # batch=2, max_slen=8, hidden_dim=32, pos_vocabsize=16
    B, S, D, V = 2, 8, 32, 16
    H = jax.random.normal(kH, (B, S, D), dtype=jnp.float32)
    W = jax.random.normal(kW, (V, D), dtype=jnp.float32) * 0.1
    b = jax.random.normal(kb, (V,), dtype=jnp.float32) * 0.1

    # Strict f32 path (default) -- exact parity with the PyTorch module.
    out = jax.block_until_ready(pos_probe_forward(H, W, b))
    ref = _reference(H, W, b)
    assert out.shape == (B, S, V)
    assert jnp.allclose(out, ref, atol=1e-5, rtol=1e-5), "mismatch vs reference"

    # Multi-step grid + ragged last block (N = 120, tm=64 -> grid=(2,)).
    B2, S2 = 3, 40
    H2 = jax.random.normal(kH2, (B2, S2, D), dtype=jnp.float32)
    out2 = jax.block_until_ready(pos_probe_forward(H2, W, b, tm=64))
    ref2 = _reference(H2, W, b)
    assert out2.shape == (B2, S2, V)
    assert jnp.allclose(out2, ref2, atol=1e-5, rtol=1e-5), "mismatch (ragged tiled path)"

    # Optional bf16 matmul-input path (looser tolerance, f32 accumulate).
    out3 = jax.block_until_ready(pos_probe_forward(H, W, b, use_bf16=True))
    assert out3.shape == (B, S, V)
    assert jnp.allclose(out3, ref, atol=3e-2, rtol=3e-2), "mismatch (bf16 path)"

    print("KERNEL_OK")
</pallas_src>

<mosaic_0001>
module attributes {stable_mosaic.version = 11 : i64} {
  func.func @_pos_probe_kernel(%arg0: i32, %arg1: memref<8x32xf32, #tpu.memory_space<vmem>>, %arg2: memref<32x16xf32, #tpu.memory_space<vmem>>, %arg3: memref<1x16xf32, #tpu.memory_space<vmem>>, %arg4: memref<8x16xf32, #tpu.memory_space<vmem>>) attributes {dimension_semantics = [#tpu.dimension_semantics<parallel>], iteration_bounds = array<i64: 2>, scalar_prefetch = 0 : i64, scratch_operands = 0 : i64, tpu.core_type = #tpu.core_type<tc>, window_params = [{transform_indices = @transform_0, window_bounds = array<i64: 8, 32>}, {pipeline_mode = #tpu.pipeline_mode<synchronous>, transform_indices = @transform_1, window_bounds = array<i64: 32, 16>}, {pipeline_mode = #tpu.pipeline_mode<synchronous>, transform_indices = @transform_2, window_bounds = array<i64: 1, 16>}, {transform_indices = @transform_3, window_bounds = array<i64: 8, 16>}]} {
    %c0 = arith.constant 0 : index
    %c0_0 = arith.constant 0 : index
    %0 = vector.load %arg1[%c0, %c0_0] : memref<8x32xf32, #tpu.memory_space<vmem>>, vector<8x32xf32>
    %c0_1 = arith.constant 0 : index
    %c0_2 = arith.constant 0 : index
    %1 = vector.load %arg2[%c0_1, %c0_2] : memref<32x16xf32, #tpu.memory_space<vmem>>, vector<32x16xf32>
    %cst = arith.constant dense<0.000000e+00> : vector<8x16xf32>
    %2 = tpu.matmul %0, %1, %cst {dimension_numbers = #tpu.dot_dimension_numbers<[1], [0], [0], [1], [0, 0, 1, 1], [], []>} : vector<8x32xf32>, vector<32x16xf32>, vector<8x16xf32> -> vector<8x16xf32>
    %c0_3 = arith.constant 0 : index
    %c0_4 = arith.constant 0 : index
    %3 = vector.load %arg3[%c0_3, %c0_4] : memref<1x16xf32, #tpu.memory_space<vmem>>, vector<1x16xf32>
    %4 = vector.broadcast %3 : vector<1x16xf32> to vector<8x16xf32>
    %5 = arith.addf %2, %4 : vector<8x16xf32>
    %cst_5 = arith.constant dense<0xFF800000> : vector<8xf32>
    %6 = vector.multi_reduction <maximumf>, %5, %cst_5 [1] : vector<8x16xf32> to vector<8xf32>
    %7 = vector.shape_cast %6 : vector<8xf32> to vector<8x1xf32>
    %8 = vector.broadcast %7 : vector<8x1xf32> to vector<8x16xf32>
    %9 = arith.subf %5, %8 : vector<8x16xf32>
    %c0_6 = arith.constant 0 : index
    %c0_7 = arith.constant 0 : index
    %10 = vector.load %arg4[%c0_6, %c0_7] : memref<8x16xf32, #tpu.memory_space<vmem>>, vector<8x16xf32>
    tpu.vector_store %arg4[%c0_6, %c0_7], %9 {strides = array<i32>} : memref<8x16xf32, #tpu.memory_space<vmem>>, vector<8x16xf32>,
    %c0_8 = arith.constant 0 : index
    %c0_9 = arith.constant 0 : index
    %11 = vector.load %arg4[%c0_8, %c0_9] : memref<8x16xf32, #tpu.memory_space<vmem>>, vector<8x16xf32>
    %12 = math.exp %11 : vector<8x16xf32>
    %cst_10 = arith.constant dense<0.000000e+00> : vector<8xf32>
    %13 = vector.multi_reduction <add>, %12, %cst_10 [1] : vector<8x16xf32> to vector<8xf32>
    %14 = vector.shape_cast %13 : vector<8xf32> to vector<8x1xf32>
    %15 = math.log %14 : vector<8x1xf32>
    %c0_11 = arith.constant 0 : index
    %c0_12 = arith.constant 0 : index
    %16 = vector.load %arg4[%c0_11, %c0_12] : memref<8x16xf32, #tpu.memory_space<vmem>>, vector<8x16xf32>
    %17 = vector.broadcast %15 : vector<8x1xf32> to vector<8x16xf32>
    %18 = arith.subf %16, %17 : vector<8x16xf32>
    %c0_13 = arith.constant 0 : index
    %c0_14 = arith.constant 0 : index
    %19 = vector.load %arg4[%c0_13, %c0_14] : memref<8x16xf32, #tpu.memory_space<vmem>>, vector<8x16xf32>
    tpu.vector_store %arg4[%c0_13, %c0_14], %18 {strides = array<i32>} : memref<8x16xf32, #tpu.memory_space<vmem>>, vector<8x16xf32>,
    return
  }
  func.func @transform_0(%arg0: i32) -> (i32, i32) {
    %c0_i32 = arith.constant 0 : i32
    %c0_i32_0 = arith.constant 0 : i32
    return %arg0, %c0_i32 : i32, i32
  }
  func.func @transform_1(%arg0: i32) -> (i32, i32) {
    %c0_i32 = arith.constant 0 : i32
    %c0_i32_0 = arith.constant 0 : i32
    %c0_i32_1 = arith.constant 0 : i32
    return %c0_i32, %c0_i32_0 : i32, i32
  }
  func.func @transform_2(%arg0: i32) -> (i32, i32) {
    %c0_i32 = arith.constant 0 : i32
    %c0_i32_0 = arith.constant 0 : i32
    %c0_i32_1 = arith.constant 0 : i32
    return %c0_i32, %c0_i32_0 : i32, i32
  }
  func.func @transform_3(%arg0: i32) -> (i32, i32) {
    %c0_i32 = arith.constant 0 : i32
    %c0_i32_0 = arith.constant 0 : i32
    return %arg0, %c0_i32 : i32, i32
  }
}

</mosaic_0001>

<llo_original>
// kernel: tpu_custom_call.1
$region0: #{tpu_custom_call.1}
  #allocation0 [shape = 'u32[]', space=smem, size = 0x4, offset = 0x4, fixed_abs, tag = 'smem constant byte address 0x4 - core index']
  #allocation1 [shape = 'u32[144,128]{1,0:T(1,128)}', space=vmem, size = 0x12000, scoped, tag = 'internal scratch']
  %s0 = inlined_call_operand.vmem [shape: f32[16,32], index: 0, kind: input, shape index: {}]
  %s1 = inlined_call_operand.vmem [shape: f32[32,16], index: 1, kind: input, shape index: {}]
  %s2 = inlined_call_operand.vmem [shape: f32[1,16], index: 2, kind: input, shape index: {}]
  %s3 = inlined_call_operand.hbm [shape: f32[16,16], index: 3, kind: output, shape index: {}]
  %s4 = sld [smem:[#allocation0]]
  $region45: #{tpu_custom_call.1} parent=0
    _
  %s6 = ssub.s32 1, %s4
  %s7 = scalar_select 0, %s6, %s4
  $region1: #{tpu_custom_call.1} parent=0
    #allocation2 [shape = 'u8[8192]{0}', space=vmem, size = 0x2000, scoped, tag = 'output window, operand 0']
    #allocation3 [shape = 's32[2]{0}', space=sflag, size = 0x8, scoped, tag = 'scoped memory for tpu_custom_call.1']
    %8 = vsyncpa [#allocation3], 0
    %s9 = scalar_lea.sflag [#allocation3], 1
    %10 = vsyncpa %s9, 0
    loop: start=0, step=1, limit=4
    $region2: #{tpu_custom_call.1} parent=1 // loop_pre_header
      _
    $region3: #{tpu_custom_call.1} parent=1 // loop_header
      %s12 = sphi 0, %s16
      %p13 = scmp.ge.s32.totalorder %s12, 4
      %s22 = sphi 0, %s24
      %s25 = sphi 0, %s22
      %s26 = sphi 0, %s25
      %s42 = sphi 0, %s26
      %s46 = sphi 0, %s46
      %s48 = sphi 0, %s46
      %s49 = sphi 0, %s48
      %s63 = sphi 0, %s49
      %s67 = sphi 0, %s67
      %s69 = sphi 0, %s67
      %s70 = sphi 0, %s69
      %s84 = sphi 0, %s70
      %s90 = sphi 0, %s92
      %s93 = sphi 0, %s90
      %s94 = sphi 0, %s93
      %s110 = sphi 0, %s94
    $region4: #{tpu_custom_call.1} parent=1 // loop_header_branch
      %15 = sbr.rel (%p13) target = $region8
    $region5: #{tpu_custom_call.1} parent=1 // loop_body
      %s17 = ssub.s32 %s12, 1
      %s18 = ssub.s32 %s12, 2
      %s19 = sadd.s32 %s12, 1
      %s20 = ssub.s32 %s12, %s19
      %p21 = scmp.eq.s32.totalorder %s20, 0
      %s23 = sadd.s32 %s22, 1
      %s24 = scalar_select %p21, %s22, %s23
      %p27 = pneg %p21
      %p28 = scmp.eq.s32.totalorder %s12, 1
      %p29 = por %p27, %p28
      %p30 = scmp.ne.s32.totalorder %s22, %s25
      %p31 = scmp.eq.s32.totalorder %s12, 0
      %p32 = por %p30, %p31
      %p33 = scmp.ne.s32.totalorder %s22, %s25
      %p34 = scmp.eq.s32.totalorder %s17, 1
      %p35 = por %p33, %p34
      %p36 = scmp.ne.s32.totalorder %s25, %s26
      %p37 = scmp.eq.s32.totalorder %s17, 0
      %p38 = por %p36, %p37
      %p39 = scmp.ne.s32.totalorder %s25, %s26
      %p40 = scmp.eq.s32.totalorder %s18, 1
      %p41 = por %p39, %p40
      %p43 = scmp.ne.s32.totalorder %s26, %s42
      %p44 = scmp.eq.s32.totalorder %s18, 0
      %p45 = por %p43, %p44
      %s47 = sadd.s32 %s46, 1
      %p50 = scmp.eq.s32.totalorder %s12, 1
      %p51 = scmp.ne.s32.totalorder %s46, %s48
      %p52 = scmp.eq.s32.totalorder %s12, 0
      %p53 = por %p51, %p52
      %p54 = scmp.ne.s32.totalorder %s46, %s48
      %p55 = scmp.eq.s32.totalorder %s17, 1
      %p56 = por %p54, %p55
      %p57 = scmp.ne.s32.totalorder %s48, %s49
      %p58 = scmp.eq.s32.totalorder %s17, 0
      %p59 = por %p57, %p58
      %p60 = scmp.ne.s32.totalorder %s48, %s49
      %p61 = scmp.eq.s32.totalorder %s18, 1
      %p62 = por %p60, %p61
      %p64 = scmp.ne.s32.totalorder %s49, %s63
      %p65 = scmp.eq.s32.totalorder %s18, 0
      %p66 = por %p64, %p65
      %s68 = sadd.s32 %s67, 1
      %p71 = scmp.eq.s32.totalorder %s12, 1
      %p72 = scmp.ne.s32.totalorder %s67, %s69
      %p73 = scmp.eq.s32.totalorder %s12, 0
      %p74 = por %p72, %p73
      %p75 = scmp.ne.s32.totalorder %s67, %s69
      %p76 = scmp.eq.s32.totalorder %s17, 1
      %p77 = por %p75, %p76
      %p78 = scmp.ne.s32.totalorder %s69, %s70
      %p79 = scmp.eq.s32.totalorder %s17, 0
      %p80 = por %p78, %p79
      %p81 = scmp.ne.s32.totalorder %s69, %s70
      %p82 = scmp.eq.s32.totalorder %s18, 1
      %p83 = por %p81, %p82
      %p85 = scmp.ne.s32.totalorder %s70, %s84
      %p86 = scmp.eq.s32.totalorder %s18, 0
      %p87 = por %p85, %p86
      %s88 = ssub.s32 %s12, %s19
      %p89 = scmp.eq.s32.totalorder %s88, 0
      %s91 = sadd.s32 %s90, 1
      %s92 = scalar_select %p89, %s90, %s91
      %p95 = pneg %p89
      %p96 = scmp.eq.s32.totalorder %s12, 1
      %p97 = por %p95, %p96
      %p98 = scmp.ne.s32.totalorder %s90, %s93
      %p99 = scmp.eq.s32.totalorder %s12, 0
      %p100 = por %p98, %p99
      %p101 = scmp.ne.s32.totalorder %s90, %s93
      %p102 = scmp.eq.s32.totalorder %s17, 1
      %p103 = por %p101, %p102
      %p104 = scmp.ne.s32.totalorder %s93, %s94
      %p105 = scmp.eq.s32.totalorder %s17, 0
      %p106 = por %p104, %p105
      %p107 = scmp.ne.s32.totalorder %s93, %s94
      %p108 = scmp.eq.s32.totalorder %s18, 1
      %p109 = por %p107, %p108
      %p111 = scmp.ne.s32.totalorder %s94, %s110
      %p112 = scmp.eq.s32.totalorder %s18, 0
      %p113 = por %p111, %p112
      %p114 = scmp.le.s32.totalorder 1, %s12
      %p115 = scmp.lt.s32.totalorder %s12, 3
      %p116 = pnand %p114, %p115
      %p117 = pneg %p116
      // Predicated region
      $region9: #{tpu_custom_call.1} parent=5 // pred_check
        _
      $region10: #{tpu_custom_call.1} parent=5 // pred_check_branch
        %119 = sbr.rel (%p116) target = $region12
      $region11: #{tpu_custom_call.1} parent=5 // pred_region
        %s120 = ssub.s32 %s12, 1
        // Predicated region
        $region13: #{tpu_custom_call.1} parent=11 // pred_check
          %p121 = pneg %p59
        $region14: #{tpu_custom_call.1} parent=11 // pred_check_branch
          %123 = sbr.rel (%p121) target = $region16
        $region15: #{tpu_custom_call.1} parent=11 // pred_region
          _
        $region16: #{tpu_custom_call.1} parent=11 // pred_fallthru
          _
        // Predicated region
        $region17: #{tpu_custom_call.1} parent=11 // pred_check
          %p124 = pneg %p80
        $region18: #{tpu_custom_call.1} parent=11 // pred_check_branch
          %126 = sbr.rel (%p124) target = $region20
        $region19: #{tpu_custom_call.1} parent=11 // pred_region
          _
        $region20: #{tpu_custom_call.1} parent=11 // pred_fallthru
          _
      $region12: #{tpu_custom_call.1} parent=5 // pred_fallthru
        _
      %p127 = scmp.lt.s32.totalorder %s12, 2
      // Predicated region
      $region21: #{tpu_custom_call.1} parent=5 // pred_check
        %p128 = pneg %p127
      $region22: #{tpu_custom_call.1} parent=5 // pred_check_branch
        %130 = sbr.rel (%p128) target = $region24
      $region23: #{tpu_custom_call.1} parent=5 // pred_region
        // Predicated region
        $region25: #{tpu_custom_call.1} parent=23 // pred_check
          %p131 = pneg %p32
        $region26: #{tpu_custom_call.1} parent=23 // pred_check_branch
          %133 = sbr.rel (%p131) target = $region28
        $region27: #{tpu_custom_call.1} parent=23 // pred_region
          %p134 = scmp.lt.s32.totalorder %s12, 1
          %s135 = scalar_select %p134, %s12, 1
          %s136 = smul.addr %s135, 8
          %s137 = scalar_lea.vmem %s0, %s136
        $region28: #{tpu_custom_call.1} parent=23 // pred_fallthru
          _
      $region24: #{tpu_custom_call.1} parent=5 // pred_fallthru
        _
      %p138 = scmp.le.s32.totalorder 1, %s12
      %p139 = scmp.lt.s32.totalorder %s12, 3
      %p140 = pnand %p138, %p139
      %p141 = pneg %p140
      // Predicated region
      $region29: #{tpu_custom_call.1} parent=5 // pred_check
        _
      $region30: #{tpu_custom_call.1} parent=5 // pred_check_branch
        %143 = sbr.rel (%p140) target = $region32
      $region31: #{tpu_custom_call.1} parent=5 // pred_region
        %s144 = ssub.s32 %s12, 1
        %p145 = scmp.lt.s32.totalorder %s17, 1
        %s146 = scalar_select %p145, %s17, 1
        %s147 = smul.addr %s146, 8
        %s148 = scalar_lea.vmem %s0, %s147
        %p149 = pneg %p38
        %p150 = pneg %p35
        %p151 = pneg %p59
        %p152 = pneg %p56
        %p153 = pneg %p80
        %p154 = pneg %p77
        %p155 = pneg %p106
        %p156 = pneg %p103
        %s157 = sand.u32 %s93, 1
        %s158 = scalar_lea.sflag [#allocation3], %s157
        %s159 = sand.u32 %s93, 1
        %s160 = smul.addr %s159, 8
        %s161 = scalar_lea.vmem [#allocation2], %s160
        %p162 = scmp.lt.s32.totalorder %s17, 1
        %s163 = scalar_select %p162, %s17, 1
        %s164 = smul.addr %s163, 8
        %s165 = scalar_lea.vmem %s0, %s164
        %v166 = vld [vmem:[%s165] sm:$0xff]
        %v167 = vld [vmem:[%s1] sm:$0xff]
        %v168 = vld [vmem:[%s1 + $0x8] sm:$0xff]
        %v169 = vld [vmem:[%s1 + $0x10] sm:$0xff]
        %v170 = vld [vmem:[%s1 + $0x18] sm:$0xff]
        %v171 = vld [vmem:[%s2] sm:$0x1]
        %v173 = vlaneseq
        %v174 = vshrl.u32 %v173, 7
        %v175 = vsub.s32 0, %v174
        %v176 = vrot.slane %v171, %v175
        %vm178 = vcmask 261120
        %v180 = vsel %vm178, %v166, 0
        %182 = vmatprep.subr.mxu0 0.0
        %183 = vmatpush1.msra.mxu0 %v167
        %184 = vmatprep.subr.mxu0 0.0
        %185 = vmatpush1.msra.mxu0 %v168
        %186 = vmatprep.subr.mxu0 0.0
        %187 = vmatpush1.msra.mxu0 %v169
        %188 = vmatprep.subr.mxu0 0.0
        %189 = vmatpush1.msra.mxu0 %v170
        %190 = vmatprep.subr.mxu0 0.0
        %191 = vmatpush1.msra.mxu0 0.0
        %192 = vmatprep.subr.mxu0 0.0
        %193 = vmatpush1.msra.mxu0 0.0
        %194 = vmatprep.subr.mxu0 0.0
        %195 = vmatpush1.msra.mxu0 0.0
        %196 = vmatprep.subr.mxu0 0.0
        %197 = vmatpush1.msra.mxu0 0.0
        %198 = vmatprep.subr.mxu0 0.0
        %199 = vmatpush1.msra.mxu0 0.0
        %200 = vmatprep.subr.mxu0 0.0
        %201 = vmatpush1.msra.mxu0 0.0
        %202 = vmatprep.subr.mxu0 0.0
        %203 = vmatpush1.msra.mxu0 0.0
        %204 = vmatprep.subr.mxu0 0.0
        %205 = vmatpush1.msra.mxu0 0.0
        %206 = vmatprep.subr.mxu0 0.0
        %207 = vmatpush1.msra.mxu0 0.0
        %208 = vmatprep.subr.mxu0 0.0
        %209 = vmatpush1.msra.mxu0 0.0
        %210 = vmatprep.subr.mxu0 0.0
        %211 = vmatpush1.msra.mxu0 0.0
        %212 = vmatprep.subr.mxu0 0.0
        %213 = vmatpush1.msra.mxu0 0.0
        %214 = vmatprep.subr.mxu0 0.0
        %215 = vmatpush1.msra.mxu0 0.0
        %216 = vmatprep.subr.mxu0 0.0
        %217 = vmatpush1.msra.mxu0 0.0
        %218 = vmatprep.subr.mxu0 0.0
        %219 = vmatpush1.msra.mxu0 0.0
        %220 = vmatprep.subr.mxu0 0.0
        %221 = vmatpush1.msra.mxu0 0.0
        %222 = vmatprep.subr.mxu0 0.0
        %223 = vmatpush1.msra.mxu0 0.0
        %224 = vmatprep.subr.mxu0 0.0
        %225 = vmatpush1.msra.mxu0 0.0
        %226 = vmatprep.subr.mxu0 0.0
        %227 = vmatpush1.msra.mxu0 0.0
        %228 = vmatprep.subr.mxu0 0.0
        %229 = vmatpush1.msra.mxu0 0.0
        %230 = vmatprep.subr.mxu0 0.0
        %231 = vmatpush1.msra.mxu0 0.0
        %232 = vmatprep.subr.mxu0 0.0
        %233 = vmatpush1.msra.mxu0 0.0
        %234 = vmatprep.subr.mxu0 0.0
        %235 = vmatpush1.msra.mxu0 0.0
        %236 = vmatprep.subr.mxu0 0.0
        %237 = vmatpush1.msra.mxu0 0.0
        %238 = vmatprep.subr.mxu0 0.0
        %239 = vmatpush1.msra.mxu0 0.0
        %240 = vmatprep.subr.mxu0 0.0
        %241 = vmatpush1.msra.mxu0 0.0
        %242 = vmatprep.subr.mxu0 0.0
        %243 = vmatpush1.msra.mxu0 0.0
        %244 = vmatprep.subr.mxu0 0.0
        %245 = vmatpush1.msra.mxu0 0.0
        %246 = vmatprep.mubr.f32.mxu0 0.0
        %247 = vmatmul.mubr.f32.gmra.mrb[0].mxu0 %v180
        %v248 = vpop.f32.mrb[0].mxu0
        %v249 = vadd.f32 %v176, %v248
        %v250 = vpop.f32.mrb[0].mxu0
        %251 = vdwg.mxu0
        %vm252 = vcmask 130048
        %v253 = vsel %vm252, %v249, -inf
        %254 = vmax.xlane.f32.xlu0 %v253
        %v255 = vpop.xlane.xlu0 %254
        %v256 = vsub.f32 %v249, %v255
        %257 = vst.msk [vmem:[%s161] sm:$0xff] %vm252, %v256
        %v258 = vld [vmem:[%s161] sm:$0xff]
        %v259 = vmul.f32 %v258, 1.442695
        %v260 = vpow.pop %v259
        %v261 = vsel %vm252, %v260, 0.0
        %262 = vadd.xlane.f32.xlu0 %v261
        %v263 = vpop.xlane.xlu0 %262
        %v264 = vlog2.pop %v263
        %v265 = vmul.f32 %v264, 0.6931472
        %v266 = vsub.f32 %v258, %v265
        %267 = vst.msk [vmem:[%s161] sm:$0xff] %vm252, %v266
        %s268 = sand.u32 %s93, 1
        %s269 = scalar_lea.sflag [#allocation3], %s268
        %s270 = sand.u32 %s93, 1
        %s271 = smul.addr %s270, 8
        %s272 = scalar_lea.vmem [#allocation2], %s271
        // Predicated region
        $region33: #{tpu_custom_call.1} parent=31 // pred_check
          %p273 = pneg %p103
        $region34: #{tpu_custom_call.1} parent=31 // pred_check_branch
          %275 = sbr.rel (%p273) target = $region36
        $region35: #{tpu_custom_call.1} parent=31 // pred_region
          %s277 = ssub.s32 128, 128
          %278 = vsyncadd %s269, %s277
          %s279 = smul.addr %s17, 128
          %s280 = scalar_lea.hbm %s3, %s279
          %s282 = sshll.u32 %s272, 4
          %s283 = int_to_ptr.vmem [resolvable:$true] %s282
          %285 = dma.vmem_to_hbm [thread:$0]  %s283, 128, %s280, %s269
        $region36: #{tpu_custom_call.1} parent=31 // pred_fallthru
          _
      $region32: #{tpu_custom_call.1} parent=5 // pred_fallthru
        _
      %p286 = scmp.le.s32.totalorder 2, %s12
      // Predicated region
      $region37: #{tpu_custom_call.1} parent=5 // pred_check
        %p287 = pneg %p286
      $region38: #{tpu_custom_call.1} parent=5 // pred_check_branch
        %289 = sbr.rel (%p287) target = $region40
      $region39: #{tpu_custom_call.1} parent=5 // pred_region
        %s290 = ssub.s32 %s12, 2
        // Predicated region
        $region41: #{tpu_custom_call.1} parent=39 // pred_check
          %p291 = pneg %p109
        $region42: #{tpu_custom_call.1} parent=39 // pred_check_branch
          %293 = sbr.rel (%p291) target = $region44
        $region43: #{tpu_custom_call.1} parent=39 // pred_region
          %s294 = sand.u32 %s94, 1
          %s295 = scalar_lea.sflag [#allocation3], %s294
          %s296 = sand.u32 %s94, 1
          %s297 = smul.addr %s296, 8
          %s298 = scalar_lea.vmem [#allocation2], %s297
          %299 = dma.done %s295, 128
        $region44: #{tpu_custom_call.1} parent=39 // pred_fallthru
          _
      $region40: #{tpu_custom_call.1} parent=5 // pred_fallthru
        _
    $region6: #{tpu_custom_call.1} parent=1 // loop_footer
      %s16 = sadd.s32 1, %s12
    $region7: #{tpu_custom_call.1} parent=1 // loop_footer_branch
      %11 = sbr.rel target = $region3
    $region8: #{tpu_custom_call.1} parent=1 // loop_exit
      _
    %300 = vsyncpa [#allocation3], 1
    %s301 = scalar_lea.sflag [#allocation3], 1
    %302 = vsyncpa %s301, 1

</llo_original>
